<compile_context>
chip_gen: v6e
topology: v6e:2x2x1
jax: 0.10.0
libtpu: 0.0.40
codegen_flags: <defaults>
</compile_context>

<pallas_src>
import jax
import jax.numpy as jnp
from jax.experimental import pallas as pl
from jax.experimental.pallas import tpu as pltpu

EPS = 1e-5
LANE = 128


def _round_up(n, m):
    return ((n + m - 1) // m) * m


# ----------------------------------------------------------------------------- kernel
def mlp_kernel(x_ref, w1_ref, b1_ref, w2_ref, b2_ref, w3_ref, b3_ref, o_ref):
    # layer1: (BN1 folded into w1/b1) Linear -> [Dropout: identity] -> ReLU
    h = jnp.dot(x_ref[...], w1_ref[...], preferred_element_type=jnp.float32)
    h = jnp.maximum(h + b1_ref[...], 0.0)
    # layer2: (BN2 folded into w2/b2) Linear -> [Dropout: identity] -> ReLU
    h = jnp.dot(h.astype(jnp.bfloat16), w2_ref[...], preferred_element_type=jnp.float32)
    h = jnp.maximum(h + b2_ref[...], 0.0)
    # layer3: Linear
    o = jnp.dot(h.astype(jnp.bfloat16), w3_ref[...], preferred_element_type=jnp.float32)
    o_ref[...] = o + b3_ref[...]


# ----------------------------------------------------------------------------- host-side folding
def fold_bn_params(p):
    """Fold eval-mode BatchNorm1d into the following Linear. All math in f32."""
    s1 = p["bn1_gamma"] * jax.lax.rsqrt(p["bn1_var"] + EPS)
    t1 = p["bn1_beta"] - p["bn1_mean"] * s1
    w1f = s1[:, None] * p["w1"]
    b1f = p["b1"] + t1 @ p["w1"]

    s2 = p["bn2_gamma"] * jax.lax.rsqrt(p["bn2_var"] + EPS)
    t2 = p["bn2_beta"] - p["bn2_mean"] * s2
    w2f = s2[:, None] * p["w2"]
    b2f = p["b2"] + t2 @ p["w2"]

    return w1f, b1f, w2f, b2f, p["w3"], p["b3"]


# ----------------------------------------------------------------------------- wrapper
def mynet_forward(x, params, *, max_tile_b=128):
    """x: (B, C, L) or already-flat (B, in_dim). Returns (B, out_dim) float32."""
    B = x.shape[0]
    x2d = x.reshape(B, -1).astype(jnp.float32)          # nn.Flatten() + .to(float32)
    in_dim = x2d.shape[1]

    # BN folded in f32 before the bf16 cast (avoids double-rounding of the scale).
    w1f, b1f, w2f, b2f, w3, b3 = fold_bn_params(params)
    h1, h2, out_dim = w1f.shape[1], w2f.shape[1], w3.shape[1]

    # Lane-dense padding of feature dims (unmasked 128-lane stores / MXU-friendly N).
    h1p = _round_up(h1, LANE)
    h2p = _round_up(h2, LANE)
    outp = _round_up(out_dim, LANE)

    # Batch tiling (multiple of the f32 sublane count 8, capped at 128).
    tb = min(max_tile_b, _round_up(B, 8))
    Bp = _round_up(B, tb)
    nb = Bp // tb

    def pad2(a, rows, cols):
        return jnp.pad(a, ((0, rows - a.shape[0]), (0, cols - a.shape[1])))

    xp = pad2(x2d, Bp, in_dim).astype(jnp.bfloat16)
    w1p = pad2(w1f, in_dim, h1p).astype(jnp.bfloat16)
    w2p = pad2(w2f, h1p, h2p).astype(jnp.bfloat16)
    w3p = pad2(w3, h2p, outp).astype(jnp.bfloat16)
    b1p = pad2(b1f.reshape(1, -1), 1, h1p).astype(jnp.float32)
    b2p = pad2(b2f.reshape(1, -1), 1, h2p).astype(jnp.float32)
    b3p = pad2(b3.reshape(1, -1), 1, outp).astype(jnp.float32)

    flops = 2 * Bp * (in_dim * h1p + h1p * h2p + h2p * outp)
    bytes_accessed = (
        2 * (xp.size + w1p.size + w2p.size + w3p.size)      # bf16 operands
        + 4 * (b1p.size + b2p.size + b3p.size)               # f32 biases
        + 4 * Bp * outp                                      # f32 output
    )

    out = pl.pallas_call(
        mlp_kernel,
        out_shape=jax.ShapeDtypeStruct((Bp, outp), jnp.float32),
        grid=(nb,),
        in_specs=[
            pl.BlockSpec((tb, in_dim), lambda i: (i, 0)),     # x tile (pipelined)
            pl.BlockSpec((in_dim, h1p), lambda i: (0, 0)),    # weights: VMEM-resident
            pl.BlockSpec((1, h1p), lambda i: (0, 0)),
            pl.BlockSpec((h1p, h2p), lambda i: (0, 0)),
            pl.BlockSpec((1, h2p), lambda i: (0, 0)),
            pl.BlockSpec((h2p, outp), lambda i: (0, 0)),
            pl.BlockSpec((1, outp), lambda i: (0, 0)),
        ],
        out_specs=pl.BlockSpec((tb, outp), lambda i: (i, 0)),
        compiler_params=pltpu.CompilerParams(
            dimension_semantics=("parallel",)),
        cost_estimate=pl.CostEstimate(
            flops=flops, bytes_accessed=bytes_accessed, transcendentals=0),
    )(xp, w1p, b1p, w2p, b2p, w3p, b3p)

    return out[:B, :out_dim]


# ----------------------------------------------------------------------------- params / references
def init_params(key, in_dim, h1, h2, out_dim):
    ks = jax.random.split(key, 6)

    def lin(kw, kb, d_in, d_out):
        # PyTorch Linear init: U(-1/sqrt(d_in), 1/sqrt(d_in)); stored as (d_in, d_out)
        bound = 1.0 / jnp.sqrt(d_in)
        w = jax.random.uniform(kw, (d_in, d_out), jnp.float32, -bound, bound)
        b = jax.random.uniform(kb, (d_out,), jnp.float32, -bound, bound)
        return w, b

    w1, b1 = lin(ks[0], ks[1], in_dim, h1)
    w2, b2 = lin(ks[2], ks[3], h1, h2)
    w3, b3 = lin(ks[4], ks[5], h2, out_dim)
    return {
        "bn1_gamma": jnp.ones((in_dim,), jnp.float32),
        "bn1_beta": jnp.zeros((in_dim,), jnp.float32),
        # deterministic non-trivial running stats so the BN path is exercised
        "bn1_mean": 0.1 * jnp.arange(in_dim, dtype=jnp.float32) / in_dim,
        "bn1_var": 1.0 + 0.05 * jnp.arange(in_dim, dtype=jnp.float32) / in_dim,
        "w1": w1, "b1": b1,
        "bn2_gamma": jnp.ones((h1,), jnp.float32),
        "bn2_beta": jnp.zeros((h1,), jnp.float32),
        "bn2_mean": 0.1 * jnp.arange(h1, dtype=jnp.float32) / h1,
        "bn2_var": 1.0 + 0.05 * jnp.arange(h1, dtype=jnp.float32) / h1,
        "w2": w2, "b2": b2,
        "w3": w3, "b3": b3,
    }


def mynet_forward_ref_f32(x, p):
    """Pure-JAX f32 eval-mode reference (exact module semantics)."""
    B = x.shape[0]
    h = x.reshape(B, -1).astype(jnp.float32)
    h = (h - p["bn1_mean"]) / jnp.sqrt(p["bn1_var"] + EPS) * p["bn1_gamma"] + p["bn1_beta"]
    h = jnp.maximum(h @ p["w1"] + p["b1"], 0.0)
    h = (h - p["bn2_mean"]) / jnp.sqrt(p["bn2_var"] + EPS) * p["bn2_gamma"] + p["bn2_beta"]
    h = jnp.maximum(h @ p["w2"] + p["b2"], 0.0)
    return h @ p["w3"] + p["b3"]


def mynet_forward_ref_bf16(x, p):
    """Emulates the kernel's precision: BN folded in f32, bf16 matmul inputs, f32 acc."""
    B = x.shape[0]
    w1f, b1f, w2f, b2f, w3, b3 = fold_bn_params(p)
    bf = jnp.bfloat16
    dot = lambda a, b: jnp.dot(a.astype(bf), b.astype(bf),
                               preferred_element_type=jnp.float32)
    h = jnp.maximum(dot(x.reshape(B, -1).astype(jnp.float32), w1f) + b1f, 0.0)
    h = jnp.maximum(dot(h, w2f) + b2f, 0.0)
    return dot(h, w3) + b3


# ----------------------------------------------------------------------------- main
if __name__ == "__main__":
    key = jax.random.PRNGKey(0)
    k_x, k_p = jax.random.split(key)

    B, C, L = 8, 4, 8                    # input (B, C, L); Flatten -> in_dim = 32
    in_dim, h1, h2, out_dim = C * L, 64, 48, 16

    x = jax.random.normal(k_x, (B, C, L), jnp.float32)
    params = init_params(k_p, in_dim, h1, h2, out_dim)

    out = jax.block_until_ready(mynet_forward(x, params))
    assert out.shape == (B, out_dim)

    # Tight check vs. a pure-JAX reference that matches the kernel's precision.
    ref_bf16 = mynet_forward_ref_bf16(x, params)
    assert jnp.allclose(out, ref_bf16, atol=2e-3, rtol=2e-3), \
        "mismatch vs bf16-matched reference"

    # Loose sanity check vs. the full-f32 module semantics.
    ref_f32 = mynet_forward_ref_f32(x, params)
    assert jnp.allclose(out, ref_f32, atol=1e-1, rtol=1e-1), \
        "mismatch vs f32 reference"

    print("KERNEL_OK")
</pallas_src>

<mosaic_0001>
module attributes {stable_mosaic.version = 11 : i64} {
  func.func @mlp_kernel(%arg0: i32, %arg1: memref<8x32xbf16, #tpu.memory_space<vmem>>, %arg2: memref<32x128xbf16, #tpu.memory_space<vmem>>, %arg3: memref<1x128xf32, #tpu.memory_space<vmem>>, %arg4: memref<128x128xbf16, #tpu.memory_space<vmem>>, %arg5: memref<1x128xf32, #tpu.memory_space<vmem>>, %arg6: memref<128x128xbf16, #tpu.memory_space<vmem>>, %arg7: memref<1x128xf32, #tpu.memory_space<vmem>>, %arg8: memref<8x128xf32, #tpu.memory_space<vmem>>) attributes {dimension_semantics = [#tpu.dimension_semantics<parallel>], iteration_bounds = array<i64: 1>, scalar_prefetch = 0 : i64, scratch_operands = 0 : i64, tpu.core_type = #tpu.core_type<tc>, window_params = [{transform_indices = @transform_0, window_bounds = array<i64: 8, 32>}, {pipeline_mode = #tpu.pipeline_mode<synchronous>, transform_indices = @transform_1, window_bounds = array<i64: 32, 128>}, {pipeline_mode = #tpu.pipeline_mode<synchronous>, transform_indices = @transform_2, window_bounds = array<i64: 1, 128>}, {pipeline_mode = #tpu.pipeline_mode<synchronous>, transform_indices = @transform_3, window_bounds = array<i64: 128, 128>}, {pipeline_mode = #tpu.pipeline_mode<synchronous>, transform_indices = @transform_4, window_bounds = array<i64: 1, 128>}, {pipeline_mode = #tpu.pipeline_mode<synchronous>, transform_indices = @transform_5, window_bounds = array<i64: 128, 128>}, {pipeline_mode = #tpu.pipeline_mode<synchronous>, transform_indices = @transform_6, window_bounds = array<i64: 1, 128>}, {transform_indices = @transform_7, window_bounds = array<i64: 8, 128>}]} {
    %c0 = arith.constant 0 : index
    %c0_0 = arith.constant 0 : index
    %0 = vector.load %arg1[%c0, %c0_0] : memref<8x32xbf16, #tpu.memory_space<vmem>>, vector<8x32xbf16>
    %c0_1 = arith.constant 0 : index
    %c0_2 = arith.constant 0 : index
    %1 = vector.load %arg2[%c0_1, %c0_2] : memref<32x128xbf16, #tpu.memory_space<vmem>>, vector<32x128xbf16>
    %cst = arith.constant dense<0.000000e+00> : vector<8x128xf32>
    %2 = tpu.matmul %0, %1, %cst {dimension_numbers = #tpu.dot_dimension_numbers<[1], [0], [0], [1], [0, 0, 1, 1], [], []>} : vector<8x32xbf16>, vector<32x128xbf16>, vector<8x128xf32> -> vector<8x128xf32>
    %c0_3 = arith.constant 0 : index
    %c0_4 = arith.constant 0 : index
    %3 = vector.load %arg3[%c0_3, %c0_4] : memref<1x128xf32, #tpu.memory_space<vmem>>, vector<1x128xf32>
    %4 = vector.broadcast %3 : vector<1x128xf32> to vector<8x128xf32>
    %5 = arith.addf %2, %4 : vector<8x128xf32>
    %cst_5 = arith.constant 0.000000e+00 : f32
    %6 = vector.broadcast %cst_5 : f32 to vector<8x128xf32>
    %7 = arith.maximumf %5, %6 : vector<8x128xf32>
    %8 = arith.truncf %7 : vector<8x128xf32> to vector<8x128xbf16>
    %c0_6 = arith.constant 0 : index
    %c0_7 = arith.constant 0 : index
    %9 = vector.load %arg4[%c0_6, %c0_7] : memref<128x128xbf16, #tpu.memory_space<vmem>>, vector<128x128xbf16>
    %cst_8 = arith.constant dense<0.000000e+00> : vector<8x128xf32>
    %10 = tpu.matmul %8, %9, %cst_8 {dimension_numbers = #tpu.dot_dimension_numbers<[1], [0], [0], [1], [0, 0, 1, 1], [], []>} : vector<8x128xbf16>, vector<128x128xbf16>, vector<8x128xf32> -> vector<8x128xf32>
    %c0_9 = arith.constant 0 : index
    %c0_10 = arith.constant 0 : index
    %11 = vector.load %arg5[%c0_9, %c0_10] : memref<1x128xf32, #tpu.memory_space<vmem>>, vector<1x128xf32>
    %12 = vector.broadcast %11 : vector<1x128xf32> to vector<8x128xf32>
    %13 = arith.addf %10, %12 : vector<8x128xf32>
    %cst_11 = arith.constant 0.000000e+00 : f32
    %14 = vector.broadcast %cst_11 : f32 to vector<8x128xf32>
    %15 = arith.maximumf %13, %14 : vector<8x128xf32>
    %16 = arith.truncf %15 : vector<8x128xf32> to vector<8x128xbf16>
    %c0_12 = arith.constant 0 : index
    %c0_13 = arith.constant 0 : index
    %17 = vector.load %arg6[%c0_12, %c0_13] : memref<128x128xbf16, #tpu.memory_space<vmem>>, vector<128x128xbf16>
    %cst_14 = arith.constant dense<0.000000e+00> : vector<8x128xf32>
    %18 = tpu.matmul %16, %17, %cst_14 {dimension_numbers = #tpu.dot_dimension_numbers<[1], [0], [0], [1], [0, 0, 1, 1], [], []>} : vector<8x128xbf16>, vector<128x128xbf16>, vector<8x128xf32> -> vector<8x128xf32>
    %c0_15 = arith.constant 0 : index
    %c0_16 = arith.constant 0 : index
    %19 = vector.load %arg7[%c0_15, %c0_16] : memref<1x128xf32, #tpu.memory_space<vmem>>, vector<1x128xf32>
    %20 = vector.broadcast %19 : vector<1x128xf32> to vector<8x128xf32>
    %21 = arith.addf %18, %20 : vector<8x128xf32>
    %c0_17 = arith.constant 0 : index
    %c0_18 = arith.constant 0 : index
    %22 = vector.load %arg8[%c0_17, %c0_18] : memref<8x128xf32, #tpu.memory_space<vmem>>, vector<8x128xf32>
    tpu.vector_store %arg8[%c0_17, %c0_18], %21 {strides = array<i32>} : memref<8x128xf32, #tpu.memory_space<vmem>>, vector<8x128xf32>,
    return
  }
  func.func @transform_0(%arg0: i32) -> (i32, i32) {
    %c0_i32 = arith.constant 0 : i32
    %c0_i32_0 = arith.constant 0 : i32
    return %arg0, %c0_i32 : i32, i32
  }
  func.func @transform_1(%arg0: i32) -> (i32, i32) {
    %c0_i32 = arith.constant 0 : i32
    %c0_i32_0 = arith.constant 0 : i32
    %c0_i32_1 = arith.constant 0 : i32
    return %c0_i32, %c0_i32_0 : i32, i32
  }
  func.func @transform_2(%arg0: i32) -> (i32, i32) {
    %c0_i32 = arith.constant 0 : i32
    %c0_i32_0 = arith.constant 0 : i32
    %c0_i32_1 = arith.constant 0 : i32
    return %c0_i32, %c0_i32_0 : i32, i32
  }
  func.func @transform_3(%arg0: i32) -> (i32, i32) {
    %c0_i32 = arith.constant 0 : i32
    %c0_i32_0 = arith.constant 0 : i32
    %c0_i32_1 = arith.constant 0 : i32
    return %c0_i32, %c0_i32_0 : i32, i32
  }
  func.func @transform_4(%arg0: i32) -> (i32, i32) {
    %c0_i32 = arith.constant 0 : i32
    %c0_i32_0 = arith.constant 0 : i32
    %c0_i32_1 = arith.constant 0 : i32
    return %c0_i32, %c0_i32_0 : i32, i32
  }
  func.func @transform_5(%arg0: i32) -> (i32, i32) {
    %c0_i32 = arith.constant 0 : i32
    %c0_i32_0 = arith.constant 0 : i32
    %c0_i32_1 = arith.constant 0 : i32
    return %c0_i32, %c0_i32_0 : i32, i32
  }
  func.func @transform_6(%arg0: i32) -> (i32, i32) {
    %c0_i32 = arith.constant 0 : i32
    %c0_i32_0 = arith.constant 0 : i32
    %c0_i32_1 = arith.constant 0 : i32
    return %c0_i32, %c0_i32_0 : i32, i32
  }
  func.func @transform_7(%arg0: i32) -> (i32, i32) {
    %c0_i32 = arith.constant 0 : i32
    %c0_i32_0 = arith.constant 0 : i32
    return %arg0, %c0_i32 : i32, i32
  }
}

</mosaic_0001>

<llo_original>
// kernel: tpu_custom_call.1
$region0: #{tpu_custom_call.1}
  #allocation0 [shape = 'u32[]', space=smem, size = 0x4, offset = 0x4, fixed_abs, tag = 'smem constant byte address 0x4 - core index']
  #allocation1 [shape = 'u32[144,128]{1,0:T(1,128)}', space=vmem, size = 0x12000, scoped, tag = 'internal scratch']
  %s0 = inlined_call_operand.hbm [shape: bf16[8,32], index: 0, kind: input, shape index: {}]
  %s1 = inlined_call_operand.hbm [shape: bf16[32,128], index: 1, kind: input, shape index: {}]
  %s2 = inlined_call_operand.vmem [shape: f32[1,128], index: 2, kind: input, shape index: {}]
  %s3 = inlined_call_operand.hbm [shape: bf16[128,128], index: 3, kind: input, shape index: {}]
  %s4 = inlined_call_operand.vmem [shape: f32[1,128], index: 4, kind: input, shape index: {}]
  %s5 = inlined_call_operand.hbm [shape: bf16[128,128], index: 5, kind: input, shape index: {}]
  %s6 = inlined_call_operand.vmem [shape: f32[1,128], index: 6, kind: input, shape index: {}]
  %s7 = inlined_call_operand.hbm [shape: f32[8,128], index: 7, kind: output, shape index: {}]
  %s8 = sld [smem:[#allocation0]]
  $region54: #{tpu_custom_call.1} parent=0
    _
  %s10 = ssub.s32 1, %s8
  %s11 = scalar_select 0, %s10, %s8
  $region1: #{tpu_custom_call.1} parent=0
    #allocation2 [shape = 'u8[2048]{0}', space=vmem, size = 0x800, scoped, tag = 'input window, operand 0, single buffered']
    #allocation3 [shape = 's32[1]{0}', space=sflag, size = 0x4, scoped, tag = 'scoped memory for tpu_custom_call.1']
    #allocation4 [shape = 's32[1]{0}', space=sflag, size = 0x4, scoped, tag = 'scoped memory for tpu_custom_call.1']
    #allocation5 [shape = 'u8[8192]{0}', space=vmem, size = 0x2000, scoped, tag = 'input window, operand 1, single buffered']
    #allocation6 [shape = 's32[1]{0}', space=sflag, size = 0x4, scoped, tag = 'scoped memory for tpu_custom_call.1']
    #allocation7 [shape = 'u8[32768]{0}', space=vmem, size = 0x8000, scoped, tag = 'input window, operand 3, single buffered']
    #allocation8 [shape = 'u8[32768]{0}', space=vmem, size = 0x8000, scoped, tag = 'input window, operand 5, single buffered']
    #allocation9 [shape = 's32[1]{0}', space=sflag, size = 0x4, scoped, tag = 'scoped memory for tpu_custom_call.1']
    #allocation10 [shape = 'u8[4096]{0}', space=vmem, size = 0x1000, scoped, tag = 'output window, operand 0, single buffered']
    %12 = vsyncpa [#allocation3], 0
    %13 = vsyncpa [#allocation6], 0
    %14 = vsyncpa [#allocation9], 0
    %15 = vsyncpa [#allocation4], 0
    // Predicated region
    $region2: #{tpu_custom_call.1} parent=1 // pred_check
      _
    $region3: #{tpu_custom_call.1} parent=1 // pred_check_branch
      %17 = sbr.rel (0) target = $region5
    $region4: #{tpu_custom_call.1} parent=1 // pred_region
      %s19 = ssub.s32 64, 64
      %20 = vsyncadd [#allocation3], %s19
      %s22 = sshll.u32 [#allocation2], 4
      %s23 = int_to_ptr.vmem [resolvable:$true] %s22
      %25 = dma.hbm_to_vmem [thread:$0]  %s0, 64, %s23, [#allocation3]
    $region5: #{tpu_custom_call.1} parent=1 // pred_fallthru
      _
    // Predicated region
    $region6: #{tpu_custom_call.1} parent=1 // pred_check
      _
    $region7: #{tpu_custom_call.1} parent=1 // pred_check_branch
      %27 = sbr.rel (0) target = $region9
    $region8: #{tpu_custom_call.1} parent=1 // pred_region
      %s29 = ssub.s32 256, 256
      %30 = vsyncadd [#allocation6], %s29
      %s31 = sshll.u32 [#allocation5], 4
      %s32 = int_to_ptr.vmem [resolvable:$true] %s31
      %37 = dma.hbm_to_vmem [thread:$0]  %s1, 256, %s32, [#allocation6], 64, 64, 4
    $region9: #{tpu_custom_call.1} parent=1 // pred_fallthru
      _
    // Predicated region
    $region10: #{tpu_custom_call.1} parent=1 // pred_check
      _
    $region11: #{tpu_custom_call.1} parent=1 // pred_check_branch
      %39 = sbr.rel (0) target = $region13
    $region12: #{tpu_custom_call.1} parent=1 // pred_region
      _
    $region13: #{tpu_custom_call.1} parent=1 // pred_fallthru
      _
    // Predicated region
    $region14: #{tpu_custom_call.1} parent=1 // pred_check
      _
    $region15: #{tpu_custom_call.1} parent=1 // pred_check_branch
      %41 = sbr.rel (0) target = $region17
    $region16: #{tpu_custom_call.1} parent=1 // pred_region
      %s43 = ssub.s32 1024, 1024
      %44 = vsyncadd [#allocation6], %s43
      %s45 = sshll.u32 [#allocation7], 4
      %s46 = int_to_ptr.vmem [resolvable:$true] %s45
      %51 = dma.hbm_to_vmem [thread:$0]  %s3, 1024, %s46, [#allocation6], 64, 64, 4
    $region17: #{tpu_custom_call.1} parent=1 // pred_fallthru
      _
    // Predicated region
    $region18: #{tpu_custom_call.1} parent=1 // pred_check
      _
    $region19: #{tpu_custom_call.1} parent=1 // pred_check_branch
      %53 = sbr.rel (0) target = $region21
    $region20: #{tpu_custom_call.1} parent=1 // pred_region
      _
    $region21: #{tpu_custom_call.1} parent=1 // pred_fallthru
      _
    // Predicated region
    $region22: #{tpu_custom_call.1} parent=1 // pred_check
      _
    $region23: #{tpu_custom_call.1} parent=1 // pred_check_branch
      %55 = sbr.rel (0) target = $region25
    $region24: #{tpu_custom_call.1} parent=1 // pred_region
      %s57 = ssub.s32 1024, 1024
      %58 = vsyncadd [#allocation9], %s57
      %s59 = sshll.u32 [#allocation8], 4
      %s60 = int_to_ptr.vmem [resolvable:$true] %s59
      %65 = dma.hbm_to_vmem [thread:$0]  %s5, 1024, %s60, [#allocation9], 64, 64, 4
    $region25: #{tpu_custom_call.1} parent=1 // pred_fallthru
      _
    // Predicated region
    $region26: #{tpu_custom_call.1} parent=1 // pred_check
      _
    $region27: #{tpu_custom_call.1} parent=1 // pred_check_branch
      %67 = sbr.rel (0) target = $region29
    $region28: #{tpu_custom_call.1} parent=1 // pred_region
      _
    $region29: #{tpu_custom_call.1} parent=1 // pred_fallthru
      _
    // Predicated region
    $region30: #{tpu_custom_call.1} parent=1 // pred_check
      _
    $region31: #{tpu_custom_call.1} parent=1 // pred_check_branch
      %69 = sbr.rel (0) target = $region33
    $region32: #{tpu_custom_call.1} parent=1 // pred_region
      %70 = dma.done [#allocation3], 64
    $region33: #{tpu_custom_call.1} parent=1 // pred_fallthru
      _
    // Predicated region
    $region34: #{tpu_custom_call.1} parent=1 // pred_check
      _
    $region35: #{tpu_custom_call.1} parent=1 // pred_check_branch
      %72 = sbr.rel (0) target = $region37
    $region36: #{tpu_custom_call.1} parent=1 // pred_region
      %73 = dma.done [#allocation6], 256
    $region37: #{tpu_custom_call.1} parent=1 // pred_fallthru
      _
    // Predicated region
    $region38: #{tpu_custom_call.1} parent=1 // pred_check
      _
    $region39: #{tpu_custom_call.1} parent=1 // pred_check_branch
      %75 = sbr.rel (0) target = $region41
    $region40: #{tpu_custom_call.1} parent=1 // pred_region
      %76 = dma.done [#allocation6], 1024
    $region41: #{tpu_custom_call.1} parent=1 // pred_fallthru
      _
    // Predicated region
    $region42: #{tpu_custom_call.1} parent=1 // pred_check
      _
    $region43: #{tpu_custom_call.1} parent=1 // pred_check_branch
      %78 = sbr.rel (0) target = $region45
    $region44: #{tpu_custom_call.1} parent=1 // pred_region
      %79 = dma.done [#allocation9], 1024
    $region45: #{tpu_custom_call.1} parent=1 // pred_fallthru
      _
    %v81 = vld [vmem:[#allocation2] sm:$0xf]
    %v82 = vld [vmem:[#allocation5] sm:$0xf]
    %v83 = vld [vmem:[#allocation5 + $0x4] sm:$0xf]
    %v84 = vld [vmem:[#allocation5 + $0x8] sm:$0xf]
    %v85 = vld [vmem:[#allocation5 + $0xc] sm:$0xf]
    %v86 = vld [vmem:[%s2] sm:$0x1]
    %v88 = vlaneseq
    %v89 = vshrl.u32 %v88, 7
    %v90 = vsub.s32 0, %v89
    %v91 = vrot.slane %v86, %v90
    %v97 = vunpack.c.l.b16 %v82
    %v98 = vunpack.c.l.b16 %v83
    %v99 = vunpack.c.l.b16 %v84
    %v100 = vunpack.c.l.b16 %v85
    %v101 = vpack.c.b16 %v98, %v97
    %v102 = vpack.c.b16 %v100, %v99
    %vm105 = vcmask 261120
    %v107 = vsel %vm105, %v81, 0
    %109 = vmatprep.subr.bf16.mxu0 0
    %110 = vmatpush1.bf16.msra.mxu0 0
    %111 = vmatprep.subr.bf16.mxu0 0
    %112 = vmatpush1.bf16.msra.mxu0 0
    %113 = vmatprep.subr.bf16.mxu0 0
    %114 = vmatpush1.bf16.msra.mxu0 0
    %115 = vmatprep.subr.bf16.mxu0 0
    %116 = vmatpush1.bf16.msra.mxu0 0
    %117 = vmatprep.subr.bf16.mxu0 0
    %118 = vmatpush1.bf16.msra.mxu0 0
    %119 = vmatprep.subr.bf16.mxu0 0
    %120 = vmatpush1.bf16.msra.mxu0 0
    %121 = vmatprep.subr.bf16.mxu0 0
    %122 = vmatpush1.bf16.msra.mxu0 %v102
    %123 = vmatprep.subr.bf16.mxu0 0
    %124 = vmatpush1.bf16.msra.mxu0 %v101
    %125 = vmatprep.subr.bf16.mxu0 0
    %126 = vmatpush2.bf16.msra.mxu0 0
    %127 = vmatprep.subr.bf16.mxu0 0
    %128 = vmatpush2.bf16.msra.mxu0 0
    %129 = vmatprep.subr.bf16.mxu0 0
    %130 = vmatpush2.bf16.msra.mxu0 0
    %131 = vmatprep.subr.bf16.mxu0 0
    %132 = vmatpush2.bf16.msra.mxu0 0
    %133 = vmatprep.subr.bf16.mxu0 0
    %134 = vmatpush2.bf16.msra.mxu0 0
    %135 = vmatprep.subr.bf16.mxu0 0
    %136 = vmatpush2.bf16.msra.mxu0 0
    %137 = vmatprep.subr.bf16.mxu0 0
    %138 = vmatpush2.bf16.msra.mxu0 0
    %139 = vmatprep.subr.bf16.mxu0 0
    %140 = vmatpush2.bf16.msra.mxu0 0
    %141 = vmatprep.mubr.bf16.mxu0 0
    %142 = vmatmul.mubr.bf16.gmra.mxu0 %v107
    %v143 = vpop.f32.mrf.mxu0
    %v144 = vadd.f32 %v91, %v143
    %v145 = vpop.f32.mrf.mxu0
    %v146 = vpop.f32.mrf.mxu0
    %v147 = vpop.f32.mrf.mxu0
    %148 = vdwg.mxu0
    %v149 = vmax.f32 %v144, 0.0
    %v150 = vpack.c.bf16 %v149, %v149
    %v151 = vld [vmem:[#allocation7] sm:$0xf]
    %v152 = vld [vmem:[#allocation7 + $0x4] sm:$0xf]
    %v153 = vld [vmem:[#allocation7 + $0x8] sm:$0xf]
    %v154 = vld [vmem:[#allocation7 + $0xc] sm:$0xf]
    %v155 = vld [vmem:[#allocation7 + $0x10] sm:$0xf]
    %v156 = vld [vmem:[#allocation7 + $0x14] sm:$0xf]
    %v157 = vld [vmem:[#allocation7 + $0x18] sm:$0xf]
    %v158 = vld [vmem:[#allocation7 + $0x1c] sm:$0xf]
    %v159 = vld [vmem:[#allocation7 + $0x20] sm:$0xf]
    %v160 = vld [vmem:[#allocation7 + $0x24] sm:$0xf]
    %v161 = vld [vmem:[#allocation7 + $0x28] sm:$0xf]
    %v162 = vld [vmem:[#allocation7 + $0x2c] sm:$0xf]
    %v163 = vld [vmem:[#allocation7 + $0x30] sm:$0xf]
    %v164 = vld [vmem:[#allocation7 + $0x34] sm:$0xf]
    %v165 = vld [vmem:[#allocation7 + $0x38] sm:$0xf]
    %v166 = vld [vmem:[#allocation7 + $0x3c] sm:$0xf]
    %v167 = vld [vmem:[%s4] sm:$0x1]
    %v169 = vlaneseq
    %v170 = vshrl.u32 %v169, 7
    %v171 = vsub.s32 0, %v170
    %v172 = vrot.slane %v167, %v171
    %v190 = vunpack.c.l.b16 %v151
    %v191 = vunpack.c.l.b16 %v152
    %v192 = vunpack.c.l.b16 %v153
    %v193 = vunpack.c.l.b16 %v154
    %v194 = vunpack.c.l.b16 %v155
    %v195 = vunpack.c.l.b16 %v156
    %v196 = vunpack.c.l.b16 %v157
    %v197 = vunpack.c.l.b16 %v158
    %v198 = vunpack.c.l.b16 %v159
    %v199 = vunpack.c.l.b16 %v160
    %v200 = vunpack.c.l.b16 %v161
    %v201 = vunpack.c.l.b16 %v162
    %v202 = vunpack.c.l.b16 %v163
    %v203 = vunpack.c.l.b16 %v164
    %v204 = vunpack.c.l.b16 %v165
    %v205 = vunpack.c.l.b16 %v166
    %v206 = vpack.c.b16 %v191, %v190
    %v207 = vpack.c.b16 %v193, %v192
    %v208 = vpack.c.b16 %v195, %v194
    %v209 = vpack.c.b16 %v197, %v196
    %v210 = vpack.c.b16 %v199, %v198
    %v211 = vpack.c.b16 %v201, %v200
    %v212 = vpack.c.b16 %v203, %v202
    %v213 = vpack.c.b16 %v205, %v204
    %222 = vmatprep.subr.bf16.mxu0 0
    %223 = vmatpush1.bf16.msra.mxu0 %v213
    %224 = vmatprep.subr.bf16.mxu0 0
    %225 = vmatpush1.bf16.msra.mxu0 %v212
    %226 = vmatprep.subr.bf16.mxu0 0
    %227 = vmatpush1.bf16.msra.mxu0 %v211
    %228 = vmatprep.subr.bf16.mxu0 0
    %229 = vmatpush1.bf16.msra.mxu0 %v210
    %230 = vmatprep.subr.bf16.mxu0 0
    %231 = vmatpush1.bf16.msra.mxu0 %v209
    %232 = vmatprep.subr.bf16.mxu0 0
    %233 = vmatpush1.bf16.msra.mxu0 %v208
    %234 = vmatprep.subr.bf16.mxu0 0
    %235 = vmatpush1.bf16.msra.mxu0 %v207
    %236 = vmatprep.subr.bf16.mxu0 0
    %237 = vmatpush1.bf16.msra.mxu0 %v206
    %238 = vmatprep.subr.bf16.mxu0 0
    %239 = vmatpush2.bf16.msra.mxu0 0
    %240 = vmatprep.subr.bf16.mxu0 0
    %241 = vmatpush2.bf16.msra.mxu0 0
    %242 = vmatprep.subr.bf16.mxu0 0
    %243 = vmatpush2.bf16.msra.mxu0 0
    %244 = vmatprep.subr.bf16.mxu0 0
    %245 = vmatpush2.bf16.msra.mxu0 0
    %246 = vmatprep.subr.bf16.mxu0 0
    %247 = vmatpush2.bf16.msra.mxu0 0
    %248 = vmatprep.subr.bf16.mxu0 0
    %249 = vmatpush2.bf16.msra.mxu0 0
    %250 = vmatprep.subr.bf16.mxu0 0
    %251 = vmatpush2.bf16.msra.mxu0 0
    %252 = vmatprep.subr.bf16.mxu0 0
    %253 = vmatpush2.bf16.msra.mxu0 0
    %254 = vmatprep.mubr.bf16.mxu0 0
    %255 = vmatmul.mubr.bf16.gmra.mxu0 %v150
    %v256 = vpop.f32.mrf.mxu0
    %v257 = vadd.f32 %v172, %v256
    %v258 = vpop.f32.mrf.mxu0
    %v259 = vpop.f32.mrf.mxu0
    %v260 = vpop.f32.mrf.mxu0
    %261 = vdwg.mxu0
    %v262 = vmax.f32 %v257, 0.0
    %v263 = vpack.c.bf16 %v262, %v262
    %v264 = vld [vmem:[#allocation8] sm:$0xf]
    %v265 = vld [vmem:[#allocation8 + $0x4] sm:$0xf]
    %v266 = vld [vmem:[#allocation8 + $0x8] sm:$0xf]
    %v267 = vld [vmem:[#allocation8 + $0xc] sm:$0xf]
    %v268 = vld [vmem:[#allocation8 + $0x10] sm:$0xf]
    %v269 = vld [vmem:[#allocation8 + $0x14] sm:$0xf]
    %v270 = vld [vmem:[#allocation8 + $0x18] sm:$0xf]
    %v271 = vld [vmem:[#allocation8 + $0x1c] sm:$0xf]
    %v272 = vld [vmem:[#allocation8 + $0x20] sm:$0xf]
    %v273 = vld [vmem:[#allocation8 + $0x24] sm:$0xf]
    %v274 = vld [vmem:[#allocation8 + $0x28] sm:$0xf]
    %v275 = vld [vmem:[#allocation8 + $0x2c] sm:$0xf]
    %v276 = vld [vmem:[#allocation8 + $0x30] sm:$0xf]
    %v277 = vld [vmem:[#allocation8 + $0x34] sm:$0xf]
    %v278 = vld [vmem:[#allocation8 + $0x38] sm:$0xf]
    %v279 = vld [vmem:[#allocation8 + $0x3c] sm:$0xf]
    %v280 = vld [vmem:[%s6] sm:$0x1]
    %v282 = vlaneseq
    %v283 = vshrl.u32 %v282, 7
    %v284 = vsub.s32 0, %v283
    %v285 = vrot.slane %v280, %v284
    %v303 = vunpack.c.l.b16 %v264
    %v304 = vunpack.c.l.b16 %v265
    %v305 = vunpack.c.l.b16 %v266
    %v306 = vunpack.c.l.b16 %v267
    %v307 = vunpack.c.l.b16 %v268
    %v308 = vunpack.c.l.b16 %v269
    %v309 = vunpack.c.l.b16 %v270
    %v310 = vunpack.c.l.b16 %v271
    %v311 = vunpack.c.l.b16 %v272
    %v312 = vunpack.c.l.b16 %v273
    %v313 = vunpack.c.l.b16 %v274
    %v314 = vunpack.c.l.b16 %v275
    %v315 = vunpack.c.l.b16 %v276
    %v316 = vunpack.c.l.b16 %v277
    %v317 = vunpack.c.l.b16 %v278
    %v318 = vunpack.c.l.b16 %v279
    %v319 = vpack.c.b16 %v304, %v303
    %v320 = vpack.c.b16 %v306, %v305
    %v321 = vpack.c.b16 %v308, %v307
    %v322 = vpack.c.b16 %v310, %v309
    %v323 = vpack.c.b16 %v312, %v311
    %v324 = vpack.c.b16 %v314, %v313
    %v325 = vpack.c.b16 %v316, %v315
    %v326 = vpack.c.b16 %v318, %v317
    %335 = vmatprep.subr.bf16.mxu0 0
    %336 = vmatpush1.bf16.msra.mxu0 %v326
    %337 = vmatprep.subr.bf16.mxu0 0
    %338 = vmatpush1.bf16.msra.mxu0 %v325
    %339 = vmatprep.subr.bf16.mxu0 0
    %340 = vmatpush1.bf16.msra.mxu0 %v324
    %341 = vmatprep.subr.bf16.mxu0 0
    %342 = vmatpush1.bf16.msra.mxu0 %v323
    %343 = vmatprep.subr.bf16.mxu0 0
    %344 = vmatpush1.bf16.msra.mxu0 %v322
    %345 = vmatprep.subr.bf16.mxu0 0
    %346 = vmatpush1.bf16.msra.mxu0 %v321
    %347 = vmatprep.subr.bf16.mxu0 0
    %348 = vmatpush1.bf16.msra.mxu0 %v320
    %349 = vmatprep.subr.bf16.mxu0 0
    %350 = vmatpush1.bf16.msra.mxu0 %v319
    %351 = vmatprep.subr.bf16.mxu0 0
    %352 = vmatpush2.bf16.msra.mxu0 0
    %353 = vmatprep.subr.bf16.mxu0 0
    %354 = vmatpush2.bf16.msra.mxu0 0
    %355 = vmatprep.subr.bf16.mxu0 0
    %356 = vmatpush2.bf16.msra.mxu0 0
    %357 = vmatprep.subr.bf16.mxu0 0
    %358 = vmatpush2.bf16.msra.mxu0 0
    %359 = vmatprep.subr.bf16.mxu0 0
    %360 = vmatpush2.bf16.msra.mxu0 0
    %361 = vmatprep.subr.bf16.mxu0 0
    %362 = vmatpush2.bf16.msra.mxu0 0
    %363 = vmatprep.subr.bf16.mxu0 0
    %364 = vmatpush2.bf16.msra.mxu0 0
    %365 = vmatprep.subr.bf16.mxu0 0
    %366 = vmatpush2.bf16.msra.mxu0 0
    %367 = vmatprep.mubr.bf16.mxu0 0
    %368 = vmatmul.mubr.bf16.gmra.mxu0 %v263
    %v369 = vpop.f32.mrf.mxu0
    %v370 = vadd.f32 %v285, %v369
    %v371 = vpop.f32.mrf.mxu0
    %v372 = vpop.f32.mrf.mxu0
    %v373 = vpop.f32.mrf.mxu0
    %374 = vdwg.mxu0
    %375 = vst [vmem:[#allocation10] sm:$0xff] %v370
    // Predicated region
    $region46: #{tpu_custom_call.1} parent=1 // pred_check
      _
    $region47: #{tpu_custom_call.1} parent=1 // pred_check_branch
      %377 = sbr.rel (0) target = $region49
    $region48: #{tpu_custom_call.1} parent=1 // pred_region
      %s379 = ssub.s32 128, 128
      %380 = vsyncadd [#allocation4], %s379
      %s382 = sshll.u32 [#allocation10], 4
      %s383 = int_to_ptr.vmem [resolvable:$true] %s382
      %385 = dma.vmem_to_hbm [thread:$0]  %s383, 128, %s7, [#allocation4]
    $region49: #{tpu_custom_call.1} parent=1 // pred_fallthru
      _
    // Predicated region
    $region50: #{tpu_custom_call.1} parent=1 // pred_check
      _
    $region51: #{tpu_custom_call.1} parent=1 // pred_check_branch
      %387 = sbr.rel (0) target = $region53
    $region52: #{tpu_custom_call.1} parent=1 // pred_region
      %388 = dma.done [#allocation4], 128
    $region53: #{tpu_custom_call.1} parent=1 // pred_fallthru
      _
    %389 = vsyncpa [#allocation3], 1
    %390 = vsyncpa [#allocation6], 1
    %391 = vsyncpa [#allocation9], 1
    %392 = vsyncpa [#allocation4], 1

</llo_original>
